<compile_context>
chip_gen: v7x
topology: tpu7x:2x2x1
jax: 0.10.0
libtpu: 0.0.40
codegen_flags: <defaults>
</compile_context>

<pallas_src>
import functools

import jax
import jax.numpy as jnp
from jax import lax
from jax.experimental import pallas as pl
from jax.experimental.pallas import tpu as pltpu


def _round_up(v, m):
    return ((v + m - 1) // m) * m


def _epilogue_dtype():
    """bf16 epilogue only on chips with a bf16 VPU path (v6e / v7x); f32 otherwise."""
    try:
        kind = jax.devices()[0].device_kind.lower()
    except Exception:
        return jnp.float32
    if "v6" in kind or "v7" in kind:
        return jnp.bfloat16
    return jnp.float32


def _value_mlp_kernel(x_ref, w1_ref, w2_ref, pvec_ref, o_ref, *, H1, H2, epi_dtype):
    """Fused 3-layer MLP, computed feature-major so the output row is lane-dense.

    x_ref    : (TB, S)          f32   natural batch-major input tile
    w1_ref   : (H1, S)          bf16  (PyTorch (out, in) layout)
    w2_ref   : (H2, H1)         bf16
    pvec_ref : (H1+2*H2+1, 1)   f32   packed [b1 | b2 | w3 | b3]
    o_ref    : (1, TB)          f32   lane-dense output row
    """
    # Unpack the consolidated small parameters (static slices, VMEM-resident).
    b1 = pvec_ref[0:H1, :].astype(epi_dtype)                    # (H1, 1)
    b2 = pvec_ref[H1:H1 + H2, :]                                # (H2, 1) f32
    w3 = pvec_ref[H1 + H2:H1 + 2 * H2, :]                       # (H2, 1) f32
    b3 = pvec_ref[H1 + 2 * H2:H1 + 2 * H2 + 1, :]               # (1, 1)  f32

    # fc1: NT matmul contracting S on both operands:
    #   (H1, S) . (TB, S)^T -> (H1, TB), f32 accumulation on the MXU.
    # The operand transpose rides under the MXU; no wrapper-side transpose needed.
    x = x_ref[...].astype(jnp.bfloat16)                         # (TB, S)
    h1 = lax.dot_general(w1_ref[...], x,
                         dimension_numbers=(((1,), (1,)), ((), ())),
                         preferred_element_type=jnp.float32)    # (H1, TB)
    # Epilogue dtype: bf16 on v6e/v7x (halves the biggest intermediate), f32 on v5e.
    h1 = jnp.maximum(h1.astype(epi_dtype) + b1, 0)

    # fc2: (H2, H1) @ (H1, TB) -> (H2, TB).
    h2 = jnp.dot(w2_ref[...], h1.astype(jnp.bfloat16),
                 preferred_element_type=jnp.float32)
    h2 = jnp.maximum(h2 + b2, 0.0)

    # fc3 (N=1 matmul) as VPU multiply + sublane reduce: keeps the MXU free and
    # produces the lane-dense (1, TB) row directly.
    out_row = jnp.sum(h2 * w3, axis=0, keepdims=True) + b3
    o_ref[...] = out_row.astype(o_ref.dtype)


def value_forward(x, params, *, batch_tile=2048):
    """x: (B, state_space) f32.  Returns (B, 1) f32 value estimates."""
    w1, b1, w2, b2, w3, b3 = params          # PyTorch layout: W is (out, in)
    B, S = x.shape
    H1 = w1.shape[0]                          # 128
    H2 = w2.shape[0]                          # 64

    # Big batch tiles amortize per-step pipeline overhead and MXU weight
    # push/drain; clamp so tiny batches aren't padded out to the full tile.
    tb = min(_round_up(B, 128), _round_up(batch_tile, 128))
    n_tiles = pl.cdiv(B, tb)
    Bp = n_tiles * tb

    # Only pad the batch remainder (no transpose / dtype pre-pass in the wrapper).
    x_in = x if Bp == B else jnp.pad(x, ((0, Bp - B), (0, 0)))

    w1b = w1.astype(jnp.bfloat16)             # (H1, S)
    w2b = w2.astype(jnp.bfloat16)             # (H2, H1)
    # Consolidate the four tiny parameter streams into one VMEM-resident column.
    pvec = jnp.concatenate(
        [b1.reshape(H1, 1), b2.reshape(H2, 1), w3.reshape(H2, 1), b3.reshape(1, 1)],
        axis=0).astype(jnp.float32)           # (H1 + 2*H2 + 1, 1)
    P = H1 + 2 * H2 + 1

    epi_dtype = _epilogue_dtype()
    kernel = functools.partial(_value_mlp_kernel, H1=H1, H2=H2, epi_dtype=epi_dtype)

    flops = 2 * Bp * (S * H1 + H1 * H2 + H2)
    bytes_accessed = (Bp * S * 4          # x read as f32
                      + w1b.size * 2 + w2b.size * 2 + P * 4
                      + Bp * 4)           # output row

    out_row = pl.pallas_call(
        kernel,
        out_shape=jax.ShapeDtypeStruct((1, Bp), jnp.float32),
        grid_spec=pltpu.PrefetchScalarGridSpec(
            num_scalar_prefetch=0,
            grid=(n_tiles,),
            in_specs=[
                pl.BlockSpec((tb, S), lambda i: (i, 0)),     # batch-tiled f32 input
                pl.BlockSpec((H1, S), lambda i: (0, 0)),     # weights stay resident
                pl.BlockSpec((H2, H1), lambda i: (0, 0)),
                pl.BlockSpec((P, 1), lambda i: (0, 0)),      # packed b1|b2|w3|b3
            ],
            out_specs=pl.BlockSpec((1, tb), lambda i: (0, i)),  # lane-dense output
        ),
        compiler_params=pltpu.CompilerParams(
            # Independent batch tiles; on v7x consider pltpu.CORE_PARALLEL if
            # "parallel" alone does not shard the grid across both TensorCores.
            dimension_semantics=("parallel",),
        ),
        cost_estimate=pl.CostEstimate(
            flops=flops, transcendentals=0, bytes_accessed=bytes_accessed),
    )(x_in, w1b, w2b, pvec)

    # (1, Bp) lane-dense row -> (B, 1) column, dropping the padded tail.
    return out_row.reshape(Bp, 1)[:B]


def init_params(key, state_space):
    """Match torch init: uniform_(weight) -> U[0,1); zeros_(bias). PyTorch (out,in) layout."""
    k1, k2, k3 = jax.random.split(key, 3)
    w1 = jax.random.uniform(k1, (128, state_space), dtype=jnp.float32)
    b1 = jnp.zeros((128,), dtype=jnp.float32)
    w2 = jax.random.uniform(k2, (64, 128), dtype=jnp.float32)
    b2 = jnp.zeros((64,), dtype=jnp.float32)
    w3 = jax.random.uniform(k3, (1, 64), dtype=jnp.float32)
    b3 = jnp.zeros((1,), dtype=jnp.float32)
    return (w1, b1, w2, b2, w3, b3)


def value_forward_ref(x, params):
    """Plain-JAX (f32) reference matching the PyTorch forward."""
    w1, b1, w2, b2, w3, b3 = params
    h1 = jnp.maximum(x @ w1.T + b1, 0.0)
    h2 = jnp.maximum(h1 @ w2.T + b2, 0.0)
    return h2 @ w3.T + b3


if __name__ == "__main__":
    key = jax.random.PRNGKey(0)
    kx, kp = jax.random.split(key)

    batch = 8
    state_space = 32
    x = jax.random.normal(kx, (batch, state_space), dtype=jnp.float32)
    params = init_params(kp, state_space)

    out = jax.block_until_ready(jax.jit(value_forward)(x, params))
    ref = value_forward_ref(x, params)

    assert out.shape == (batch, 1)
    # bf16 MXU inputs with f32 accumulation -> looser tolerance than pure f32.
    assert jnp.allclose(out, ref, rtol=2e-2, atol=1.0), "mismatch vs reference"

    print("KERNEL_OK")
</pallas_src>

<mosaic_0001>
module attributes {stable_mosaic.version = 11 : i64} {
  func.func @_value_mlp_kernel(%arg0: i32, %arg1: memref<128x32xf32, #tpu.memory_space<vmem>>, %arg2: memref<128x32xbf16, #tpu.memory_space<vmem>>, %arg3: memref<64x128xbf16, #tpu.memory_space<vmem>>, %arg4: memref<257x1xf32, #tpu.memory_space<vmem>>, %arg5: memref<1x128xf32, #tpu.memory_space<vmem>>) attributes {dimension_semantics = [#tpu.dimension_semantics<parallel>], iteration_bounds = array<i64: 1>, scalar_prefetch = 0 : i64, scratch_operands = 0 : i64, tpu.core_type = #tpu.core_type<tc>, window_params = [{transform_indices = @transform_0, window_bounds = array<i64: 128, 32>}, {pipeline_mode = #tpu.pipeline_mode<synchronous>, transform_indices = @transform_1, window_bounds = array<i64: 128, 32>}, {pipeline_mode = #tpu.pipeline_mode<synchronous>, transform_indices = @transform_2, window_bounds = array<i64: 64, 128>}, {pipeline_mode = #tpu.pipeline_mode<synchronous>, transform_indices = @transform_3, window_bounds = array<i64: 257, 1>}, {transform_indices = @transform_4, window_bounds = array<i64: 1, 128>}]} {
    %c0 = arith.constant 0 : index
    %c0_0 = arith.constant 0 : index
    %0 = vector.load %arg4[%c0, %c0_0] : memref<257x1xf32, #tpu.memory_space<vmem>>, vector<128x1xf32>
    %c128 = arith.constant 128 : index
    %c0_1 = arith.constant 0 : index
    %1 = vector.load %arg4[%c128, %c0_1] : memref<257x1xf32, #tpu.memory_space<vmem>>, vector<64x1xf32>
    %c192 = arith.constant 192 : index
    %c0_2 = arith.constant 0 : index
    %2 = vector.load %arg4[%c192, %c0_2] : memref<257x1xf32, #tpu.memory_space<vmem>>, vector<64x1xf32>
    %c256 = arith.constant 256 : index
    %c0_3 = arith.constant 0 : index
    %3 = vector.load %arg4[%c256, %c0_3] : memref<257x1xf32, #tpu.memory_space<vmem>>, vector<1x1xf32>
    %c0_4 = arith.constant 0 : index
    %c0_5 = arith.constant 0 : index
    %4 = vector.load %arg1[%c0_4, %c0_5] : memref<128x32xf32, #tpu.memory_space<vmem>>, vector<128x32xf32>
    %5 = arith.truncf %4 : vector<128x32xf32> to vector<128x32xbf16>
    %c0_6 = arith.constant 0 : index
    %c0_7 = arith.constant 0 : index
    %6 = vector.load %arg2[%c0_6, %c0_7] : memref<128x32xbf16, #tpu.memory_space<vmem>>, vector<128x32xbf16>
    %cst = arith.constant dense<0.000000e+00> : vector<128x128xf32>
    %7 = tpu.matmul %6, %5, %cst {dimension_numbers = #tpu.dot_dimension_numbers<[1], [1], [0], [0], [0, 0, 1, 0], [], []>} : vector<128x32xbf16>, vector<128x32xbf16>, vector<128x128xf32> -> vector<128x128xf32>
    %8 = vector.broadcast %0 : vector<128x1xf32> to vector<128x128xf32>
    %9 = arith.addf %7, %8 : vector<128x128xf32>
    %cst_8 = arith.constant 0.000000e+00 : f32
    %10 = vector.broadcast %cst_8 : f32 to vector<128x128xf32>
    %11 = arith.maximumf %9, %10 : vector<128x128xf32>
    %c0_9 = arith.constant 0 : index
    %c0_10 = arith.constant 0 : index
    %12 = vector.load %arg3[%c0_9, %c0_10] : memref<64x128xbf16, #tpu.memory_space<vmem>>, vector<64x128xbf16>
    %13 = arith.truncf %11 : vector<128x128xf32> to vector<128x128xbf16>
    %cst_11 = arith.constant dense<0.000000e+00> : vector<64x128xf32>
    %14 = tpu.matmul %12, %13, %cst_11 {dimension_numbers = #tpu.dot_dimension_numbers<[1], [0], [0], [1], [0, 0, 1, 1], [], []>} : vector<64x128xbf16>, vector<128x128xbf16>, vector<64x128xf32> -> vector<64x128xf32>
    %15 = vector.broadcast %1 : vector<64x1xf32> to vector<64x128xf32>
    %16 = arith.addf %14, %15 : vector<64x128xf32>
    %cst_12 = arith.constant 0.000000e+00 : f32
    %17 = vector.broadcast %cst_12 : f32 to vector<64x128xf32>
    %18 = arith.maximumf %16, %17 : vector<64x128xf32>
    %19 = vector.broadcast %2 : vector<64x1xf32> to vector<64x128xf32>
    %20 = arith.mulf %18, %19 : vector<64x128xf32>
    %cst_13 = arith.constant dense<0.000000e+00> : vector<128xf32>
    %21 = vector.multi_reduction <add>, %20, %cst_13 [0] : vector<64x128xf32> to vector<128xf32>
    %22 = vector.shape_cast %21 : vector<128xf32> to vector<1x128xf32>
    %23 = vector.broadcast %3 : vector<1x1xf32> to vector<1x128xf32>
    %24 = arith.addf %22, %23 : vector<1x128xf32>
    %c0_14 = arith.constant 0 : index
    %c0_15 = arith.constant 0 : index
    %25 = vector.load %arg5[%c0_14, %c0_15] : memref<1x128xf32, #tpu.memory_space<vmem>>, vector<1x128xf32>
    tpu.vector_store %arg5[%c0_14, %c0_15], %24 {strides = array<i32>} : memref<1x128xf32, #tpu.memory_space<vmem>>, vector<1x128xf32>,
    return
  }
  func.func @transform_0(%arg0: i32) -> (i32, i32) {
    %c0_i32 = arith.constant 0 : i32
    %c0_i32_0 = arith.constant 0 : i32
    return %arg0, %c0_i32 : i32, i32
  }
  func.func @transform_1(%arg0: i32) -> (i32, i32) {
    %c0_i32 = arith.constant 0 : i32
    %c0_i32_0 = arith.constant 0 : i32
    %c0_i32_1 = arith.constant 0 : i32
    return %c0_i32, %c0_i32_0 : i32, i32
  }
  func.func @transform_2(%arg0: i32) -> (i32, i32) {
    %c0_i32 = arith.constant 0 : i32
    %c0_i32_0 = arith.constant 0 : i32
    %c0_i32_1 = arith.constant 0 : i32
    return %c0_i32, %c0_i32_0 : i32, i32
  }
  func.func @transform_3(%arg0: i32) -> (i32, i32) {
    %c0_i32 = arith.constant 0 : i32
    %c0_i32_0 = arith.constant 0 : i32
    %c0_i32_1 = arith.constant 0 : i32
    return %c0_i32, %c0_i32_0 : i32, i32
  }
  func.func @transform_4(%arg0: i32) -> (i32, i32) {
    %c0_i32 = arith.constant 0 : i32
    %c0_i32_0 = arith.constant 0 : i32
    return %c0_i32, %arg0 : i32, i32
  }
}

</mosaic_0001>

<llo_original>
// kernel: value_forward.1
$region0: #{value_forward.1}
  #allocation0 [shape = 'u32[]', space=smem, size = 0x4, offset = 0x4, fixed_abs, tag = 'smem constant byte address 0x4 - core index']
  #allocation1 [shape = 'u32[144,128]{1,0:T(1,128)}', space=vmem, size = 0x12000, scoped, tag = 'internal scratch']
  %s0 = inlined_call_operand.vmem [shape: f32[128,32], index: 0, kind: input, shape index: {}]
  %s1 = inlined_call_operand.vmem [shape: bf16[128,32], index: 1, kind: input, shape index: {}]
  %s2 = inlined_call_operand.vmem [shape: bf16[64,128], index: 2, kind: input, shape index: {}]
  %s3 = inlined_call_operand.vmem [shape: f32[257,1], index: 3, kind: input, shape index: {}]
  %s4 = inlined_call_operand.vmem [shape: f32[1,128], index: 4, kind: output, shape index: {}]
  %s5 = sld [smem:[#allocation0]]
  $region26: #{value_forward.1} parent=0
    _
  %s7 = ssub.s32 1, %s5
  %s8 = scalar_select 0, %s7, %s5
  // Predicated region
  $region2: #{value_forward.1} parent=0 // pred_check
    _
  $region3: #{value_forward.1} parent=0 // pred_check_branch
    %10 = sbr.rel (0) target = $region5
  $region4: #{value_forward.1} parent=0 // pred_region
    _
  $region5: #{value_forward.1} parent=0 // pred_fallthru
    _
  // Predicated region
  $region6: #{value_forward.1} parent=0 // pred_check
    _
  $region7: #{value_forward.1} parent=0 // pred_check_branch
    %12 = sbr.rel (0) target = $region9
  $region8: #{value_forward.1} parent=0 // pred_region
    _
  $region9: #{value_forward.1} parent=0 // pred_fallthru
    _
  // Predicated region
  $region10: #{value_forward.1} parent=0 // pred_check
    _
  $region11: #{value_forward.1} parent=0 // pred_check_branch
    %14 = sbr.rel (0) target = $region13
  $region12: #{value_forward.1} parent=0 // pred_region
    _
  $region13: #{value_forward.1} parent=0 // pred_fallthru
    _
  // Predicated region
  $region14: #{value_forward.1} parent=0 // pred_check
    _
  $region15: #{value_forward.1} parent=0 // pred_check_branch
    %16 = sbr.rel (0) target = $region17
  $region16: #{value_forward.1} parent=0 // pred_region
    _
  $region17: #{value_forward.1} parent=0 // pred_fallthru
    _
  %v18 = vld [vmem:[%s3] sm:$0xff]
  %v19 = vld [vmem:[%s3 + $0x8] sm:$0xff]
  %v20 = vld [vmem:[%s3 + $0x10] sm:$0xff]
  %v21 = vld [vmem:[%s3 + $0x18] sm:$0xff]
  %v22 = vld [vmem:[%s3 + $0x20] sm:$0xff]
  %v23 = vld [vmem:[%s3 + $0x28] sm:$0xff]
  %v24 = vld [vmem:[%s3 + $0x30] sm:$0xff]
  %v25 = vld [vmem:[%s3 + $0x38] sm:$0xff]
  %v26 = vld [vmem:[%s3 + $0x40] sm:$0xff]
  %v27 = vld [vmem:[%s3 + $0x48] sm:$0xff]
  %v28 = vld [vmem:[%s3 + $0x50] sm:$0xff]
  %v29 = vld [vmem:[%s3 + $0x58] sm:$0xff]
  %v30 = vld [vmem:[%s3 + $0x60] sm:$0xff]
  %v31 = vld [vmem:[%s3 + $0x68] sm:$0xff]
  %v32 = vld [vmem:[%s3 + $0x70] sm:$0xff]
  %v33 = vld [vmem:[%s3 + $0x78] sm:$0xff]
  %v34 = vld [vmem:[%s3 + $0x80] sm:$0xff]
  %v35 = vld [vmem:[%s3 + $0x88] sm:$0xff]
  %v36 = vld [vmem:[%s3 + $0x90] sm:$0xff]
  %v37 = vld [vmem:[%s3 + $0x98] sm:$0xff]
  %v38 = vld [vmem:[%s3 + $0xa0] sm:$0xff]
  %v39 = vld [vmem:[%s3 + $0xa8] sm:$0xff]
  %v40 = vld [vmem:[%s3 + $0xb0] sm:$0xff]
  %v41 = vld [vmem:[%s3 + $0xb8] sm:$0xff]
  %v42 = vld [vmem:[%s3 + $0xc0] sm:$0xff]
  %v43 = vld [vmem:[%s3 + $0xc8] sm:$0xff]
  %v44 = vld [vmem:[%s3 + $0xd0] sm:$0xff]
  %v45 = vld [vmem:[%s3 + $0xd8] sm:$0xff]
  %v46 = vld [vmem:[%s3 + $0xe0] sm:$0xff]
  %v47 = vld [vmem:[%s3 + $0xe8] sm:$0xff]
  %v48 = vld [vmem:[%s3 + $0xf0] sm:$0xff]
  %v49 = vld [vmem:[%s3 + $0xf8] sm:$0xff]
  %v50 = vld [vmem:[%s3 + $0x100] sm:$0x1]
  %v51 = vld [vmem:[%s0] sm:$0xff]
  %v52 = vld [vmem:[%s0 + $0x8] sm:$0xff]
  %v53 = vld [vmem:[%s0 + $0x10] sm:$0xff]
  %v54 = vld [vmem:[%s0 + $0x18] sm:$0xff]
  %v55 = vld [vmem:[%s0 + $0x20] sm:$0xff]
  %v56 = vld [vmem:[%s0 + $0x28] sm:$0xff]
  %v57 = vld [vmem:[%s0 + $0x30] sm:$0xff]
  %v58 = vld [vmem:[%s0 + $0x38] sm:$0xff]
  %v59 = vld [vmem:[%s0 + $0x40] sm:$0xff]
  %v60 = vld [vmem:[%s0 + $0x48] sm:$0xff]
  %v61 = vld [vmem:[%s0 + $0x50] sm:$0xff]
  %v62 = vld [vmem:[%s0 + $0x58] sm:$0xff]
  %v63 = vld [vmem:[%s0 + $0x60] sm:$0xff]
  %v64 = vld [vmem:[%s0 + $0x68] sm:$0xff]
  %v65 = vld [vmem:[%s0 + $0x70] sm:$0xff]
  %v66 = vld [vmem:[%s0 + $0x78] sm:$0xff]
  %v67 = vpack.c.bf16 %v52, %v51
  %v68 = vpack.c.bf16 %v54, %v53
  %v69 = vpack.c.bf16 %v56, %v55
  %v70 = vpack.c.bf16 %v58, %v57
  %v71 = vpack.c.bf16 %v60, %v59
  %v72 = vpack.c.bf16 %v62, %v61
  %v73 = vpack.c.bf16 %v64, %v63
  %v74 = vpack.c.bf16 %v66, %v65
  %v75 = vld [vmem:[%s1] sm:$0xf]
  %v76 = vld [vmem:[%s1 + $0x4] sm:$0xf]
  %v77 = vld [vmem:[%s1 + $0x8] sm:$0xf]
  %v78 = vld [vmem:[%s1 + $0xc] sm:$0xf]
  %v79 = vld [vmem:[%s1 + $0x10] sm:$0xf]
  %v80 = vld [vmem:[%s1 + $0x14] sm:$0xf]
  %v81 = vld [vmem:[%s1 + $0x18] sm:$0xf]
  %v82 = vld [vmem:[%s1 + $0x1c] sm:$0xf]
  %v83 = vld [vmem:[%s1 + $0x20] sm:$0xf]
  %v84 = vld [vmem:[%s1 + $0x24] sm:$0xf]
  %v85 = vld [vmem:[%s1 + $0x28] sm:$0xf]
  %v86 = vld [vmem:[%s1 + $0x2c] sm:$0xf]
  %v87 = vld [vmem:[%s1 + $0x30] sm:$0xf]
  %v88 = vld [vmem:[%s1 + $0x34] sm:$0xf]
  %v89 = vld [vmem:[%s1 + $0x38] sm:$0xf]
  %v90 = vld [vmem:[%s1 + $0x3c] sm:$0xf]
  %92 = vset.pattern.permute.xlu0 0
  %93 = vperm.xlu0 %92, %v18
  %v94 = vpop.permute.xlu0 %93
  %97 = vset.pattern.permute.xlu0 0
  %98 = vperm.xlu0 %97, %v19
  %v99 = vpop.permute.xlu0 %98
  %102 = vset.pattern.permute.xlu0 0
  %103 = vperm.xlu0 %102, %v20
  %v104 = vpop.permute.xlu0 %103
  %107 = vset.pattern.permute.xlu0 0
  %108 = vperm.xlu0 %107, %v21
  %v109 = vpop.permute.xlu0 %108
  %112 = vset.pattern.permute.xlu0 0
  %113 = vperm.xlu0 %112, %v22
  %v114 = vpop.permute.xlu0 %113
  %117 = vset.pattern.permute.xlu0 0
  %118 = vperm.xlu0 %117, %v23
  %v119 = vpop.permute.xlu0 %118
  %122 = vset.pattern.permute.xlu0 0
  %123 = vperm.xlu0 %122, %v24
  %v124 = vpop.permute.xlu0 %123
  %127 = vset.pattern.permute.xlu0 0
  %128 = vperm.xlu0 %127, %v25
  %v129 = vpop.permute.xlu0 %128
  %132 = vset.pattern.permute.xlu0 0
  %133 = vperm.xlu0 %132, %v26
  %v134 = vpop.permute.xlu0 %133
  %137 = vset.pattern.permute.xlu0 0
  %138 = vperm.xlu0 %137, %v27
  %v139 = vpop.permute.xlu0 %138
  %142 = vset.pattern.permute.xlu0 0
  %143 = vperm.xlu0 %142, %v28
  %v144 = vpop.permute.xlu0 %143
  %147 = vset.pattern.permute.xlu0 0
  %148 = vperm.xlu0 %147, %v29
  %v149 = vpop.permute.xlu0 %148
  %152 = vset.pattern.permute.xlu0 0
  %153 = vperm.xlu0 %152, %v30
  %v154 = vpop.permute.xlu0 %153
  %157 = vset.pattern.permute.xlu0 0
  %158 = vperm.xlu0 %157, %v31
  %v159 = vpop.permute.xlu0 %158
  %162 = vset.pattern.permute.xlu0 0
  %163 = vperm.xlu0 %162, %v32
  %v164 = vpop.permute.xlu0 %163
  %167 = vset.pattern.permute.xlu0 0
  %168 = vperm.xlu0 %167, %v33
  %v169 = vpop.permute.xlu0 %168
  %v187 = vunpack.c.l.b16 %v75
  %v188 = vunpack.c.l.b16 %v76
  %v189 = vunpack.c.l.b16 %v77
  %v190 = vunpack.c.l.b16 %v78
  %v191 = vunpack.c.l.b16 %v79
  %v192 = vunpack.c.l.b16 %v80
  %v193 = vunpack.c.l.b16 %v81
  %v194 = vunpack.c.l.b16 %v82
  %v195 = vunpack.c.l.b16 %v83
  %v196 = vunpack.c.l.b16 %v84
  %v197 = vunpack.c.l.b16 %v85
  %v198 = vunpack.c.l.b16 %v86
  %v199 = vunpack.c.l.b16 %v87
  %v200 = vunpack.c.l.b16 %v88
  %v201 = vunpack.c.l.b16 %v89
  %v202 = vunpack.c.l.b16 %v90
  %v203 = vpack.c.b16 %v188, %v187
  %v204 = vpack.c.b16 %v190, %v189
  %v205 = vpack.c.b16 %v192, %v191
  %v206 = vpack.c.b16 %v194, %v193
  %v207 = vpack.c.b16 %v196, %v195
  %v208 = vpack.c.b16 %v198, %v197
  %v209 = vpack.c.b16 %v200, %v199
  %v210 = vpack.c.b16 %v202, %v201
  %vm211 = vcmask 261120
  %v213 = vsel %vm211, %v203, 0
  %v216 = vsel %vm211, %v204, 0
  %v219 = vsel %vm211, %v205, 0
  %v222 = vsel %vm211, %v206, 0
  %v225 = vsel %vm211, %v207, 0
  %v228 = vsel %vm211, %v208, 0
  %v231 = vsel %vm211, %v209, 0
  %v234 = vsel %vm211, %v210, 0
  %v237 = vsel %vm211, %v67, 0
  %v240 = vsel %vm211, %v68, 0
  %v243 = vsel %vm211, %v69, 0
  %v246 = vsel %vm211, %v70, 0
  %v249 = vsel %vm211, %v71, 0
  %v252 = vsel %vm211, %v72, 0
  %v255 = vsel %vm211, %v73, 0
  %v258 = vsel %vm211, %v74, 0
  %260 = vmatprep.subr.bf16.mxu0 0
  %261 = vmatpush1.bf16.xpose.msra.mxu0 %v237
  %262 = vmatprep.subr.bf16.mxu0 0
  %263 = vmatpush1.bf16.xpose.msra.mxu0 %v240
  %264 = vmatprep.subr.bf16.mxu0 0
  %265 = vmatpush1.bf16.xpose.msra.mxu0 %v243
  %266 = vmatprep.subr.bf16.mxu0 0
  %267 = vmatpush1.bf16.xpose.msra.mxu0 %v246
  %268 = vmatprep.subr.bf16.mxu0 0
  %269 = vmatpush1.bf16.xpose.msra.mxu0 %v249
  %270 = vmatprep.subr.bf16.mxu0 0
  %271 = vmatpush1.bf16.xpose.msra.mxu0 %v252
  %272 = vmatprep.subr.bf16.mxu0 0
  %273 = vmatpush1.bf16.xpose.msra.mxu0 %v255
  %274 = vmatprep.subr.bf16.mxu0 0
  %275 = vmatpush1.bf16.xpose.msra.mxu0 %v258
  %276 = vmatprep.subr.bf16.mxu0 0
  %277 = vmatpush1.bf16.xpose.msra.mxu0 0
  %278 = vmatprep.subr.bf16.mxu0 0
  %279 = vmatpush1.bf16.xpose.msra.mxu0 0
  %280 = vmatprep.subr.bf16.mxu0 0
  %281 = vmatpush1.bf16.xpose.msra.mxu0 0
  %282 = vmatprep.subr.bf16.mxu0 0
  %283 = vmatpush1.bf16.xpose.msra.mxu0 0
  %284 = vmatprep.subr.bf16.mxu0 0
  %285 = vmatpush1.bf16.xpose.msra.mxu0 0
  %286 = vmatprep.subr.bf16.mxu0 0
  %287 = vmatpush1.bf16.xpose.msra.mxu0 0
  %288 = vmatprep.subr.bf16.mxu0 0
  %289 = vmatpush1.bf16.xpose.msra.mxu0 0
  %290 = vmatprep.subr.bf16.mxu0 0
  %291 = vmatpush1.bf16.xpose.msra.mxu0 0
  %292 = vmatprep.mubr.bf16.mxu0 0
  %293 = vmatmul.mubr.bf16.gmra.mrb[0].mxu0 %v213
  %v294 = vpop.f32.mrb[0].mxu0
  %v295 = vadd.f32 %v94, %v294
  %v296 = vpop.f32.mrb[0].mxu0
  %v297 = vpop.f32.mrb[0].mxu0
  %v298 = vadd.f32 %v99, %v297
  %v299 = vpop.f32.mrb[0].mxu0
  %300 = vmatprep.mubr.bf16.mxu0 0
  %301 = vmatmul.mubr.bf16.gmra.mrb[0].mxu0 %v216
  %v302 = vpop.f32.mrb[0].mxu0
  %v303 = vadd.f32 %v104, %v302
  %v304 = vpop.f32.mrb[0].mxu0
  %v305 = vpop.f32.mrb[0].mxu0
  %v306 = vadd.f32 %v109, %v305
  %v307 = vpop.f32.mrb[0].mxu0
  %308 = vmatprep.mubr.bf16.mxu0 0
  %309 = vmatmul.mubr.bf16.gmra.mrb[0].mxu0 %v219
  %v310 = vpop.f32.mrb[0].mxu0
  %v311 = vadd.f32 %v114, %v310
  %v312 = vpop.f32.mrb[0].mxu0
  %v313 = vpop.f32.mrb[0].mxu0
  %v314 = vadd.f32 %v119, %v313
  %v315 = vpop.f32.mrb[0].mxu0
  %316 = vmatprep.mubr.bf16.mxu0 0
  %317 = vmatmul.mubr.bf16.gmra.mrb[0].mxu0 %v222
  %v318 = vpop.f32.mrb[0].mxu0
  %v319 = vadd.f32 %v124, %v318
  %v320 = vpop.f32.mrb[0].mxu0
  %v321 = vpop.f32.mrb[0].mxu0
  %v322 = vadd.f32 %v129, %v321
  %v323 = vpop.f32.mrb[0].mxu0
  %324 = vmatprep.mubr.bf16.mxu0 0
  %325 = vmatmul.mubr.bf16.gmra.mrb[0].mxu0 %v225
  %v326 = vpop.f32.mrb[0].mxu0
  %v327 = vadd.f32 %v134, %v326
  %v328 = vpop.f32.mrb[0].mxu0
  %v329 = vpop.f32.mrb[0].mxu0
  %v330 = vadd.f32 %v139, %v329
  %v331 = vpop.f32.mrb[0].mxu0
  %332 = vmatprep.mubr.bf16.mxu0 0
  %333 = vmatmul.mubr.bf16.gmra.mrb[0].mxu0 %v228
  %v334 = vpop.f32.mrb[0].mxu0
  %v335 = vadd.f32 %v144, %v334
  %v336 = vpop.f32.mrb[0].mxu0
  %v337 = vpop.f32.mrb[0].mxu0
  %v338 = vadd.f32 %v149, %v337
  %v339 = vpop.f32.mrb[0].mxu0
  %340 = vmatprep.mubr.bf16.mxu0 0
  %341 = vmatmul.mubr.bf16.gmra.mrb[0].mxu0 %v231
  %v342 = vpop.f32.mrb[0].mxu0
  %v343 = vadd.f32 %v154, %v342
  %v344 = vpop.f32.mrb[0].mxu0
  %v345 = vpop.f32.mrb[0].mxu0
  %v346 = vadd.f32 %v159, %v345
  %v347 = vpop.f32.mrb[0].mxu0
  %348 = vmatprep.mubr.bf16.mxu0 0
  %349 = vmatmul.mubr.bf16.gmra.mrb[0].mxu0 %v234
  %v350 = vpop.f32.mrb[0].mxu0
  %v351 = vadd.f32 %v164, %v350
  %v352 = vpop.f32.mrb[0].mxu0
  %v353 = vpop.f32.mrb[0].mxu0
  %v354 = vadd.f32 %v169, %v353
  %v355 = vpop.f32.mrb[0].mxu0
  %356 = vdwg.mxu0
  %v357 = vmax.f32 %v295, 0.0
  %v358 = vmax.f32 %v298, 0.0
  %v359 = vmax.f32 %v303, 0.0
  %v360 = vmax.f32 %v306, 0.0
  %v361 = vmax.f32 %v311, 0.0
  %v362 = vmax.f32 %v314, 0.0
  %v363 = vmax.f32 %v319, 0.0
  %v364 = vmax.f32 %v322, 0.0
  %v365 = vmax.f32 %v327, 0.0
  %v366 = vmax.f32 %v330, 0.0
  %v367 = vmax.f32 %v335, 0.0
  %v368 = vmax.f32 %v338, 0.0
  %v369 = vmax.f32 %v343, 0.0
  %v370 = vmax.f32 %v346, 0.0
  %v371 = vmax.f32 %v351, 0.0
  %v372 = vmax.f32 %v354, 0.0
  %v373 = vld [vmem:[%s2] sm:$0xf]
  %v374 = vld [vmem:[%s2 + $0x4] sm:$0xf]
  %v375 = vld [vmem:[%s2 + $0x8] sm:$0xf]
  %v376 = vld [vmem:[%s2 + $0xc] sm:$0xf]
  %v377 = vld [vmem:[%s2 + $0x10] sm:$0xf]
  %v378 = vld [vmem:[%s2 + $0x14] sm:$0xf]
  %v379 = vld [vmem:[%s2 + $0x18] sm:$0xf]
  %v380 = vld [vmem:[%s2 + $0x1c] sm:$0xf]
  %v381 = vpack.c.bf16 %v358, %v357
  %v382 = vpack.c.bf16 %v360, %v359
  %v383 = vpack.c.bf16 %v362, %v361
  %v384 = vpack.c.bf16 %v364, %v363
  %v385 = vpack.c.bf16 %v366, %v365
  %v386 = vpack.c.bf16 %v368, %v367
  %v387 = vpack.c.bf16 %v370, %v369
  %v388 = vpack.c.bf16 %v372, %v371
  %390 = vset.pattern.permute.xlu0 0
  %391 = vperm.xlu0 %390, %v34
  %v392 = vpop.permute.xlu0 %391
  %395 = vset.pattern.permute.xlu0 0
  %396 = vperm.xlu0 %395, %v35
  %v397 = vpop.permute.xlu0 %396
  %400 = vset.pattern.permute.xlu0 0
  %401 = vperm.xlu0 %400, %v36
  %v402 = vpop.permute.xlu0 %401
  %405 = vset.pattern.permute.xlu0 0
  %406 = vperm.xlu0 %405, %v37
  %v407 = vpop.permute.xlu0 %406
  %410 = vset.pattern.permute.xlu0 0
  %411 = vperm.xlu0 %410, %v38
  %v412 = vpop.permute.xlu0 %411
  %415 = vset.pattern.permute.xlu0 0
  %416 = vperm.xlu0 %415, %v39
  %v417 = vpop.permute.xlu0 %416
  %420 = vset.pattern.permute.xlu0 0
  %421 = vperm.xlu0 %420, %v40
  %v422 = vpop.permute.xlu0 %421
  %425 = vset.pattern.permute.xlu0 0
  %426 = vperm.xlu0 %425, %v41
  %v427 = vpop.permute.xlu0 %426
  %v437 = vunpack.c.l.b16 %v373
  %v438 = vunpack.c.l.b16 %v374
  %v439 = vunpack.c.l.b16 %v375
  %v440 = vunpack.c.l.b16 %v376
  %v441 = vunpack.c.l.b16 %v377
  %v442 = vunpack.c.l.b16 %v378
  %v443 = vunpack.c.l.b16 %v379
  %v444 = vunpack.c.l.b16 %v380
  %v445 = vpack.c.b16 %v438, %v437
  %v446 = vpack.c.b16 %v440, %v439
  %v447 = vpack.c.b16 %v442, %v441
  %v448 = vpack.c.b16 %v444, %v443
  %453 = vmatprep.subr.bf16.mxu0 0
  %454 = vmatpush1.bf16.msra.mxu0 %v381
  %455 = vmatprep.subr.bf16.mxu0 0
  %456 = vmatpush1.bf16.msra.mxu0 %v382
  %457 = vmatprep.subr.bf16.mxu0 0
  %458 = vmatpush1.bf16.msra.mxu0 %v383
  %459 = vmatprep.subr.bf16.mxu0 0
  %460 = vmatpush1.bf16.msra.mxu0 %v384
  %461 = vmatprep.subr.bf16.mxu0 0
  %462 = vmatpush1.bf16.msra.mxu0 %v385
  %463 = vmatprep.subr.bf16.mxu0 0
  %464 = vmatpush1.bf16.msra.mxu0 %v386
  %465 = vmatprep.subr.bf16.mxu0 0
  %466 = vmatpush1.bf16.msra.mxu0 %v387
  %467 = vmatprep.subr.bf16.mxu0 0
  %468 = vmatpush1.bf16.msra.mxu0 %v388
  %469 = vmatprep.subr.bf16.mxu0 0
  %470 = vmatpush1.bf16.msra.mxu0 0
  %471 = vmatprep.subr.bf16.mxu0 0
  %472 = vmatpush1.bf16.msra.mxu0 0
  %473 = vmatprep.subr.bf16.mxu0 0
  %474 = vmatpush1.bf16.msra.mxu0 0
  %475 = vmatprep.subr.bf16.mxu0 0
  %476 = vmatpush1.bf16.msra.mxu0 0
  %477 = vmatprep.subr.bf16.mxu0 0
  %478 = vmatpush1.bf16.msra.mxu0 0
  %479 = vmatprep.subr.bf16.mxu0 0
  %480 = vmatpush1.bf16.msra.mxu0 0
  %481 = vmatprep.subr.bf16.mxu0 0
  %482 = vmatpush1.bf16.msra.mxu0 0
  %483 = vmatprep.subr.bf16.mxu0 0
  %484 = vmatpush1.bf16.msra.mxu0 0
  %485 = vmatprep.mubr.bf16.mxu0 0
  %486 = vmatmul.mubr.bf16.gmra.mrb[0].mxu0 %v445
  %v487 = vpop.f32.mrb[0].mxu0
  %v488 = vadd.f32 %v392, %v487
  %v489 = vpop.f32.mrb[0].mxu0
  %v490 = vpop.f32.mrb[0].mxu0
  %v491 = vadd.f32 %v397, %v490
  %v492 = vpop.f32.mrb[0].mxu0
  %493 = vmatprep.mubr.bf16.mxu0 0
  %494 = vmatmul.mubr.bf16.gmra.mrb[0].mxu0 %v446
  %v495 = vpop.f32.mrb[0].mxu0
  %v496 = vadd.f32 %v402, %v495
  %v497 = vpop.f32.mrb[0].mxu0
  %v498 = vpop.f32.mrb[0].mxu0
  %v499 = vadd.f32 %v407, %v498
  %v500 = vpop.f32.mrb[0].mxu0
  %501 = vmatprep.mubr.bf16.mxu0 0
  %502 = vmatmul.mubr.bf16.gmra.mrb[0].mxu0 %v447
  %v503 = vpop.f32.mrb[0].mxu0
  %v504 = vadd.f32 %v412, %v503
  %v505 = vpop.f32.mrb[0].mxu0
  %v506 = vpop.f32.mrb[0].mxu0
  %v507 = vadd.f32 %v417, %v506
  %v508 = vpop.f32.mrb[0].mxu0
  %509 = vmatprep.mubr.bf16.mxu0 0
  %510 = vmatmul.mubr.bf16.gmra.mrb[0].mxu0 %v448
  %v511 = vpop.f32.mrb[0].mxu0
  %v512 = vadd.f32 %v422, %v511
  %v513 = vpop.f32.mrb[0].mxu0
  %v514 = vpop.f32.mrb[0].mxu0
  %v515 = vadd.f32 %v427, %v514
  %v516 = vpop.f32.mrb[0].mxu0
  %517 = vdwg.mxu0
  %v518 = vmax.f32 %v488, 0.0
  %v519 = vmax.f32 %v491, 0.0
  %v520 = vmax.f32 %v496, 0.0
  %v521 = vmax.f32 %v499, 0.0
  %v522 = vmax.f32 %v504, 0.0
  %v523 = vmax.f32 %v507, 0.0
  %v524 = vmax.f32 %v512, 0.0
  %v525 = vmax.f32 %v515, 0.0
  %527 = vset.pattern.permute.xlu0 0
  %528 = vperm.xlu0 %527, %v42
  %v529 = vpop.permute.xlu0 %528
  %532 = vset.pattern.permute.xlu0 0
  %533 = vperm.xlu0 %532, %v43
  %v534 = vpop.permute.xlu0 %533
  %537 = vset.pattern.permute.xlu0 0
  %538 = vperm.xlu0 %537, %v44
  %v539 = vpop.permute.xlu0 %538
  %542 = vset.pattern.permute.xlu0 0
  %543 = vperm.xlu0 %542, %v45
  %v544 = vpop.permute.xlu0 %543
  %547 = vset.pattern.permute.xlu0 0
  %548 = vperm.xlu0 %547, %v46
  %v549 = vpop.permute.xlu0 %548
  %552 = vset.pattern.permute.xlu0 0
  %553 = vperm.xlu0 %552, %v47
  %v554 = vpop.permute.xlu0 %553
  %557 = vset.pattern.permute.xlu0 0
  %558 = vperm.xlu0 %557, %v48
  %v559 = vpop.permute.xlu0 %558
  %562 = vset.pattern.permute.xlu0 0
  %563 = vperm.xlu0 %562, %v49
  %v564 = vpop.permute.xlu0 %563
  %v566 = vmul.f32 %v518, %v529
  %v567 = vmul.f32 %v519, %v534
  %v568 = vmul.f32 %v520, %v539
  %v569 = vmul.f32 %v521, %v544
  %v570 = vmul.f32 %v522, %v549
  %v571 = vmul.f32 %v523, %v554
  %v572 = vmul.f32 %v524, %v559
  %v573 = vmul.f32 %v525, %v564
  %v574 = vadd.f32 %v566, %v567
  %v575 = vadd.f32 %v574, %v568
  %v576 = vadd.f32 %v575, %v569
  %v577 = vadd.f32 %v576, %v570
  %v578 = vadd.f32 %v577, %v571
  %v579 = vadd.f32 %v578, %v572
  %v580 = vadd.f32 %v579, %v573
  %v581 = vrot.slane %v580, 4
  %v582 = vadd.f32 %v580, %v581
  %v583 = vrot.slane %v582, 2
  %v584 = vadd.f32 %v582, %v583
  %v585 = vrot.slane %v584, 1
  %v586 = vadd.f32 %v584, %v585
  %588 = vset.pattern.permute.xlu0 0
  %589 = vperm.xlu0 %588, %v50
  %v590 = vpop.permute.xlu0 %589
  %v592 = vadd.f32 %v586, %v590
  %593 = vst [vmem:[%s4] sm:$0x1] %v592
  // Predicated region
  $region18: #{value_forward.1} parent=0 // pred_check
    _
  $region19: #{value_forward.1} parent=0 // pred_check_branch
    %595 = sbr.rel (0) target = $region21
  $region20: #{value_forward.1} parent=0 // pred_region
    _
  $region21: #{value_forward.1} parent=0 // pred_fallthru
    _
  // Predicated region
  $region22: #{value_forward.1} parent=0 // pred_check
    _
  $region23: #{value_forward.1} parent=0 // pred_check_branch
    %597 = sbr.rel (0) target = $region25
  $region24: #{value_forward.1} parent=0 // pred_region
    _
  $region25: #{value_forward.1} parent=0 // pred_fallthru
    _

</llo_original>
